<compile_context>
chip_gen: v5e
topology: v5e:2x2
jax: 0.10.0
libtpu: 0.0.40
codegen_flags: <defaults>
</compile_context>

<pallas_src>
import functools

import jax
import jax.numpy as jnp
from jax import lax
from jax.experimental import pallas as pl
from jax.experimental.pallas import tpu as pltpu


def bayesian_head_kernel(x_ref,      # [B, Fp]    backbone features (zero-padded), f32
                         wmu_ref,    # [Op, Fp]   weight_mu, bf16 (zero-padded rows/cols)
                         wls_ref,    # [Op, Fp]   weight_log_sigma, bf16
                         bmu_ref,    # [1, Op]    bias_mu, f32
                         bls_ref,    # [1, Op]    bias_log_sigma, f32
                         eps_ref,    # [S*B, Op]  standard-normal noise, f32
                         out_ref,    # [S*B, Op]  softmax probabilities, f32
                         *, num_samples, num_classes):
    h = jnp.maximum(x_ref[...], 0.0)                              # relu, [B, Fp]

    # bf16 weights streamed from HBM (DMA bytes already halved); upcast once in VMEM.
    wmu = wmu_ref[...].astype(jnp.float32)                        # [Op, Fp]
    # exp in f32 (v5e EUP has no bf16).  For frozen params exp(2*log_sigma) could be
    # precomputed host-side; kept in-kernel so the kernel also serves training.
    sigma2_w = jnp.exp(2.0 * wls_ref[...].astype(jnp.float32))    # [Op, Fp]

    # Local reparameterization: logits ~ N(mean, var) per example.
    # Contract feature dims directly (no in-kernel transpose of the [Op, Fp] weights).
    mean = lax.dot_general(h, wmu,
                           dimension_numbers=(((1,), (1,)), ((), ())),
                           preferred_element_type=jnp.float32)    # [B, Op]
    mean = mean + bmu_ref[...]
    var = lax.dot_general(h * h, sigma2_w,
                          dimension_numbers=(((1,), (1,)), ((), ())),
                          preferred_element_type=jnp.float32)     # [B, Op]
    var = var + jnp.exp(2.0 * bls_ref[...])
    std = jnp.sqrt(var)                                           # [B, Op]

    # Broadcast mean/std over the MC-sample axis (rows of eps/out are sample-major,
    # row = s*B + b, so a sublane tile of the [B, Op] stats lines up with it).
    logits = (jnp.tile(mean, (num_samples, 1))
              + jnp.tile(std, (num_samples, 1)) * eps_ref[...])   # [S*B, Op]

    # Mask padded class lanes so they take no probability mass in the softmax.
    col = lax.broadcasted_iota(jnp.int32, logits.shape, 1)
    logits = jnp.where(col < num_classes, logits, -1e30)

    m = jnp.max(logits, axis=-1, keepdims=True)
    e = jnp.exp(logits - m)
    out_ref[...] = e / jnp.sum(e, axis=-1, keepdims=True)


def prepare_bayesian_params(weight_mu, weight_log_sigma, bias_mu, bias_log_sigma):
    """One-time (init) padding/casting of BayesianLinearLayer parameters.

    Pads the feature dim to a multiple of 128 (lanes) and the class dim to a
    multiple of 128 (lane-dense output), and stores the weight matrices in bf16.
    Padded feature columns see h == 0, and padded class rows are masked in-kernel,
    so padding is inert.
    """
    O, F = weight_mu.shape
    Fp = ((F + 127) // 128) * 128
    Op = ((O + 127) // 128) * 128

    def pad_w(a, dtype):
        a = a.astype(jnp.float32)
        return jnp.pad(a, ((0, Op - O), (0, Fp - F))).astype(dtype)

    return dict(
        wmu=pad_w(weight_mu, jnp.bfloat16),
        wls=pad_w(weight_log_sigma, jnp.bfloat16),
        bmu=jnp.pad(bias_mu.astype(jnp.float32), (0, Op - O)).reshape(1, Op),
        bls=jnp.pad(bias_log_sigma.astype(jnp.float32), (0, Op - O)).reshape(1, Op),
        in_features=F, num_classes=O, Fp=Fp, Op=Op,
    )


def bayesian_nn_forward(features, params, key, num_samples=1):
    """features: [B, F] float32 (backbone output).

    Returns softmax probabilities of shape [num_samples, B, num_classes]; each
    Monte-Carlo sample uses an independent Gaussian draw of the Bayesian layer
    (local reparameterization).
    """
    B, F = features.shape
    assert F == params["in_features"]
    Fp, Op, O = params["Fp"], params["Op"], params["num_classes"]

    # Per-call work: only the small feature tensor is padded.
    x_p = jnp.pad(features.astype(jnp.float32), ((0, 0), (0, Fp - F)))

    SB = num_samples * B
    eps = jax.random.normal(key, (SB, Op), dtype=jnp.float32)

    kernel = functools.partial(bayesian_head_kernel,
                               num_samples=num_samples, num_classes=O)

    # Single block, no grid: everything (~0.6 MiB) is resident in VMEM.
    probs_padded = pl.pallas_call(
        kernel,
        out_shape=jax.ShapeDtypeStruct((SB, Op), jnp.float32),
        in_specs=[pl.BlockSpec(memory_space=pltpu.MemorySpace.VMEM)
                  for _ in range(6)],
        out_specs=pl.BlockSpec(memory_space=pltpu.MemorySpace.VMEM),
    )(x_p, params["wmu"], params["wls"], params["bmu"], params["bls"], eps)

    return probs_padded.reshape(num_samples, B, Op)[..., :O]


if __name__ == "__main__":
    B = 2        # batch
    F = 1000     # backbone feature dim (torchvision classifiers output 1000)
    O = 100      # num_classes
    S = 4        # Monte-Carlo forward samples (S=1 reproduces a single forward pass)

    key = jax.random.PRNGKey(0)
    k_x, k_wmu, k_wls, k_bmu, k_bls, k_eps = jax.random.split(key, 6)

    # Backbone-feature stand-in (what ResNet50/EfficientNet_B0 would produce).
    features = jax.random.normal(k_x, (B, F), dtype=jnp.float32)

    # BayesianLinearLayer(1000, 100) parameters (deterministic synthetic init;
    # shapes match the module's __init__).
    weight_mu = 0.01 * jax.random.normal(k_wmu, (O, F), dtype=jnp.float32)
    weight_log_sigma = -3.0 + 0.01 * jax.random.normal(k_wls, (O, F), dtype=jnp.float32)
    bias_mu = 0.01 * jax.random.normal(k_bmu, (O,), dtype=jnp.float32)
    bias_log_sigma = -3.0 + 0.01 * jax.random.normal(k_bls, (O,), dtype=jnp.float32)

    # One-time parameter preparation (padding + bf16 cast), then the forward pass.
    params = prepare_bayesian_params(weight_mu, weight_log_sigma,
                                     bias_mu, bias_log_sigma)
    probs = bayesian_nn_forward(features, params, key=k_eps, num_samples=S)
    probs = jax.block_until_ready(probs)

    assert probs.shape == (S, B, O)
    row_sums = jnp.sum(probs, axis=-1)
    assert bool(jnp.all(jnp.abs(row_sums - 1.0) < 1e-4)), "softmax rows must sum to 1"
    assert bool(jnp.all(probs >= 0.0)), "probabilities must be non-negative"

    print("KERNEL_OK")
</pallas_src>

<mosaic_0001>
module attributes {stable_mosaic.version = 11 : i64} {
  func.func @bayesian_head_kernel(%arg0: memref<2x1024xf32, #tpu.memory_space<vmem>>, %arg1: memref<128x1024xbf16, #tpu.memory_space<vmem>>, %arg2: memref<128x1024xbf16, #tpu.memory_space<vmem>>, %arg3: memref<1x128xf32, #tpu.memory_space<vmem>>, %arg4: memref<1x128xf32, #tpu.memory_space<vmem>>, %arg5: memref<8x128xf32, #tpu.memory_space<vmem>>, %arg6: memref<8x128xf32, #tpu.memory_space<vmem>>) attributes {dimension_semantics = [], scalar_prefetch = 0 : i64, scratch_operands = 0 : i64, tpu.core_type = #tpu.core_type<tc>} {
    %c0 = arith.constant 0 : index
    %c0_0 = arith.constant 0 : index
    %0 = vector.load %arg0[%c0, %c0_0] : memref<2x1024xf32, #tpu.memory_space<vmem>>, vector<2x1024xf32>
    %cst = arith.constant 0.000000e+00 : f32
    %1 = vector.broadcast %cst : f32 to vector<2x1024xf32>
    %2 = arith.maximumf %0, %1 : vector<2x1024xf32>
    %c0_1 = arith.constant 0 : index
    %c0_2 = arith.constant 0 : index
    %3 = vector.load %arg1[%c0_1, %c0_2] : memref<128x1024xbf16, #tpu.memory_space<vmem>>, vector<128x1024xbf16>
    %4 = arith.extf %3 : vector<128x1024xbf16> to vector<128x1024xf32>
    %c0_3 = arith.constant 0 : index
    %c0_4 = arith.constant 0 : index
    %5 = vector.load %arg2[%c0_3, %c0_4] : memref<128x1024xbf16, #tpu.memory_space<vmem>>, vector<128x1024xbf16>
    %6 = arith.extf %5 : vector<128x1024xbf16> to vector<128x1024xf32>
    %cst_5 = arith.constant 2.000000e+00 : f32
    %7 = vector.broadcast %cst_5 : f32 to vector<128x1024xf32>
    %8 = arith.mulf %7, %6 : vector<128x1024xf32>
    %9 = math.exp %8 : vector<128x1024xf32>
    %cst_6 = arith.constant dense<0.000000e+00> : vector<2x128xf32>
    %10 = tpu.matmul %2, %4, %cst_6 {dimension_numbers = #tpu.dot_dimension_numbers<[1], [1], [0], [0], [0, 0, 1, 0], [], []>} : vector<2x1024xf32>, vector<128x1024xf32>, vector<2x128xf32> -> vector<2x128xf32>
    %c0_7 = arith.constant 0 : index
    %c0_8 = arith.constant 0 : index
    %11 = vector.load %arg3[%c0_7, %c0_8] : memref<1x128xf32, #tpu.memory_space<vmem>>, vector<1x128xf32>
    %12 = vector.broadcast %11 : vector<1x128xf32> to vector<2x128xf32>
    %13 = arith.addf %10, %12 : vector<2x128xf32>
    %14 = arith.mulf %2, %2 : vector<2x1024xf32>
    %cst_9 = arith.constant dense<0.000000e+00> : vector<2x128xf32>
    %15 = tpu.matmul %14, %9, %cst_9 {dimension_numbers = #tpu.dot_dimension_numbers<[1], [1], [0], [0], [0, 0, 1, 0], [], []>} : vector<2x1024xf32>, vector<128x1024xf32>, vector<2x128xf32> -> vector<2x128xf32>
    %c0_10 = arith.constant 0 : index
    %c0_11 = arith.constant 0 : index
    %16 = vector.load %arg4[%c0_10, %c0_11] : memref<1x128xf32, #tpu.memory_space<vmem>>, vector<1x128xf32>
    %cst_12 = arith.constant 2.000000e+00 : f32
    %17 = vector.broadcast %cst_12 : f32 to vector<1x128xf32>
    %18 = arith.mulf %17, %16 : vector<1x128xf32>
    %19 = math.exp %18 : vector<1x128xf32>
    %20 = vector.broadcast %19 : vector<1x128xf32> to vector<2x128xf32>
    %21 = arith.addf %15, %20 : vector<2x128xf32>
    %22 = math.sqrt %21 : vector<2x128xf32>
    %23 = tpu.concatenate %13, %13, %13, %13 in 0 : vector<2x128xf32>, vector<2x128xf32>, vector<2x128xf32>, vector<2x128xf32> -> vector<8x128xf32>
    %24 = tpu.concatenate %22, %22, %22, %22 in 0 : vector<2x128xf32>, vector<2x128xf32>, vector<2x128xf32>, vector<2x128xf32> -> vector<8x128xf32>
    %c0_13 = arith.constant 0 : index
    %c0_14 = arith.constant 0 : index
    %25 = vector.load %arg5[%c0_13, %c0_14] : memref<8x128xf32, #tpu.memory_space<vmem>>, vector<8x128xf32>
    %26 = arith.mulf %24, %25 : vector<8x128xf32>
    %27 = arith.addf %23, %26 : vector<8x128xf32>
    %28 = tpu.iota {dimensions = array<i32: 1>} : vector<8x128xi32>
    %c100_i32 = arith.constant 100 : i32
    %29 = vector.broadcast %c100_i32 : i32 to vector<8x128xi32>
    %30 = arith.cmpi slt, %28, %29 : vector<8x128xi32>
    %cst_15 = arith.constant -1.000000e+30 : f32
    %31 = vector.broadcast %cst_15 : f32 to vector<8x128xf32>
    %32 = arith.select %30, %27, %31 : vector<8x128xi1>, vector<8x128xf32>
    %cst_16 = arith.constant dense<0xFF800000> : vector<8xf32>
    %33 = vector.multi_reduction <maximumf>, %32, %cst_16 [1] : vector<8x128xf32> to vector<8xf32>
    %34 = vector.shape_cast %33 : vector<8xf32> to vector<8x1xf32>
    %35 = vector.broadcast %34 : vector<8x1xf32> to vector<8x128xf32>
    %36 = arith.subf %32, %35 : vector<8x128xf32>
    %37 = math.exp %36 : vector<8x128xf32>
    %cst_17 = arith.constant dense<0.000000e+00> : vector<8xf32>
    %38 = vector.multi_reduction <add>, %37, %cst_17 [1] : vector<8x128xf32> to vector<8xf32>
    %39 = vector.shape_cast %38 : vector<8xf32> to vector<8x1xf32>
    %40 = vector.broadcast %39 : vector<8x1xf32> to vector<8x128xf32>
    %41 = arith.divf %37, %40 : vector<8x128xf32>
    %c0_18 = arith.constant 0 : index
    %c0_19 = arith.constant 0 : index
    %42 = vector.load %arg6[%c0_18, %c0_19] : memref<8x128xf32, #tpu.memory_space<vmem>>, vector<8x128xf32>
    tpu.vector_store %arg6[%c0_18, %c0_19], %41 {strides = array<i32>} : memref<8x128xf32, #tpu.memory_space<vmem>>, vector<8x128xf32>,
    return
  }
}

</mosaic_0001>

<llo_original>
// kernel: tpu_custom_call.1
$region0: #{tpu_custom_call.1}
  #allocation0 [shape = 'u32[]', space=smem, size = 0x4, offset = 0x4, fixed_abs, tag = 'smem constant byte address 0x4 - core index']
  #allocation1 [shape = 'u32[72,128]{1,0:T(1,128)}', space=vmem, size = 0x9000, scoped, tag = 'internal scratch']
  %s0 = inlined_call_operand.hbm [shape: f32[2,1024], index: 0, kind: input, shape index: {}]
  %s1 = inlined_call_operand.hbm [shape: bf16[128,1024], index: 1, kind: input, shape index: {}]
  %s2 = inlined_call_operand.hbm [shape: bf16[128,1024], index: 2, kind: input, shape index: {}]
  %s3 = inlined_call_operand.vmem [shape: f32[1,128], index: 3, kind: input, shape index: {}]
  %s4 = inlined_call_operand.vmem [shape: f32[1,128], index: 4, kind: input, shape index: {}]
  %s5 = inlined_call_operand.hbm [shape: f32[8,128], index: 5, kind: input, shape index: {}]
  %s6 = inlined_call_operand.hbm [shape: f32[8,128], index: 6, kind: output, shape index: {}]
  %s7 = sld [smem:[#allocation0]]
  $region50: #{tpu_custom_call.1} parent=0
    _
  %s9 = ssub.s32 1, %s7
  %s10 = scalar_select 0, %s9, %s7
  $region1: #{tpu_custom_call.1} parent=0
    #allocation2 [shape = 'u8[8192]{0}', space=vmem, size = 0x2000, scoped, tag = 'input window, operand 0, single buffered']
    #allocation3 [shape = 's32[1]{0}', space=sflag, size = 0x4, scoped, tag = 'scoped memory for tpu_custom_call.1']
    #allocation4 [shape = 's32[1]{0}', space=sflag, size = 0x4, scoped, tag = 'scoped memory for tpu_custom_call.1']
    #allocation5 [shape = 'u8[262144]{0}', space=vmem, size = 0x40000, scoped, tag = 'input window, operand 1, single buffered']
    #allocation6 [shape = 's32[1]{0}', space=sflag, size = 0x4, scoped, tag = 'scoped memory for tpu_custom_call.1']
    #allocation7 [shape = 'u8[262144]{0}', space=vmem, size = 0x40000, scoped, tag = 'input window, operand 2, single buffered']
    #allocation8 [shape = 'u8[4096]{0}', space=vmem, size = 0x1000, scoped, tag = 'input window, operand 5, single buffered']
    #allocation9 [shape = 's32[1]{0}', space=sflag, size = 0x4, scoped, tag = 'scoped memory for tpu_custom_call.1']
    #allocation10 [shape = 'u8[4096]{0}', space=vmem, size = 0x1000, scoped, tag = 'output window, operand 0, single buffered']
    %11 = vsyncpa [#allocation3], 0
    %12 = vsyncpa [#allocation6], 0
    %13 = vsyncpa [#allocation9], 0
    %14 = vsyncpa [#allocation4], 0
    // Predicated region
    $region2: #{tpu_custom_call.1} parent=1 // pred_check
      _
    $region3: #{tpu_custom_call.1} parent=1 // pred_check_branch
      %16 = sbr.rel (0) target = $region5
    $region4: #{tpu_custom_call.1} parent=1 // pred_region
      %18 = vsyncadd [#allocation3], 0
      %s20 = sshll.u32 %s0, 4
      %s21 = int_to_ptr.hbm [resolvable:$true] %s20
      %s22 = sshll.u32 [#allocation2], 4
      %s23 = int_to_ptr.vmem [resolvable:$true] %s22
      %25 = dma.hbm_to_vmem [thread:$0]  %s21, 256, %s23, [#allocation3]
    $region5: #{tpu_custom_call.1} parent=1 // pred_fallthru
      _
    // Predicated region
    $region6: #{tpu_custom_call.1} parent=1 // pred_check
      _
    $region7: #{tpu_custom_call.1} parent=1 // pred_check_branch
      %27 = sbr.rel (0) target = $region9
    $region8: #{tpu_custom_call.1} parent=1 // pred_region
      %29 = vsyncadd [#allocation6], 0
      %s30 = sshll.u32 %s1, 4
      %s31 = int_to_ptr.hbm [resolvable:$true] %s30
      %s32 = sshll.u32 [#allocation5], 4
      %s33 = int_to_ptr.vmem [resolvable:$true] %s32
      %38 = dma.hbm_to_vmem [thread:$0]  %s31, 8192, %s33, [#allocation6], 512, 512, 32
    $region9: #{tpu_custom_call.1} parent=1 // pred_fallthru
      _
    // Predicated region
    $region10: #{tpu_custom_call.1} parent=1 // pred_check
      _
    $region11: #{tpu_custom_call.1} parent=1 // pred_check_branch
      %40 = sbr.rel (0) target = $region13
    $region12: #{tpu_custom_call.1} parent=1 // pred_region
      %42 = vsyncadd [#allocation6], 0
      %s43 = sshll.u32 %s2, 4
      %s44 = int_to_ptr.hbm [resolvable:$true] %s43
      %s45 = sshll.u32 [#allocation7], 4
      %s46 = int_to_ptr.vmem [resolvable:$true] %s45
      %51 = dma.hbm_to_vmem [thread:$0]  %s44, 8192, %s46, [#allocation6], 512, 512, 32
    $region13: #{tpu_custom_call.1} parent=1 // pred_fallthru
      _
    // Predicated region
    $region14: #{tpu_custom_call.1} parent=1 // pred_check
      _
    $region15: #{tpu_custom_call.1} parent=1 // pred_check_branch
      %53 = sbr.rel (0) target = $region17
    $region16: #{tpu_custom_call.1} parent=1 // pred_region
      _
    $region17: #{tpu_custom_call.1} parent=1 // pred_fallthru
      _
    // Predicated region
    $region18: #{tpu_custom_call.1} parent=1 // pred_check
      _
    $region19: #{tpu_custom_call.1} parent=1 // pred_check_branch
      %55 = sbr.rel (0) target = $region21
    $region20: #{tpu_custom_call.1} parent=1 // pred_region
      _
    $region21: #{tpu_custom_call.1} parent=1 // pred_fallthru
      _
    // Predicated region
    $region22: #{tpu_custom_call.1} parent=1 // pred_check
      _
    $region23: #{tpu_custom_call.1} parent=1 // pred_check_branch
      %57 = sbr.rel (0) target = $region25
    $region24: #{tpu_custom_call.1} parent=1 // pred_region
      %59 = vsyncadd [#allocation9], 0
      %s61 = sshll.u32 %s5, 4
      %s62 = int_to_ptr.hbm [resolvable:$true] %s61
      %s63 = sshll.u32 [#allocation8], 4
      %s64 = int_to_ptr.vmem [resolvable:$true] %s63
      %66 = dma.hbm_to_vmem [thread:$0]  %s62, 128, %s64, [#allocation9]
    $region25: #{tpu_custom_call.1} parent=1 // pred_fallthru
      _
    // Predicated region
    $region26: #{tpu_custom_call.1} parent=1 // pred_check
      _
    $region27: #{tpu_custom_call.1} parent=1 // pred_check_branch
      %68 = sbr.rel (0) target = $region29
    $region28: #{tpu_custom_call.1} parent=1 // pred_region
      %70 = dma.done [#allocation3], 256
    $region29: #{tpu_custom_call.1} parent=1 // pred_fallthru
      _
    // Predicated region
    $region30: #{tpu_custom_call.1} parent=1 // pred_check
      _
    $region31: #{tpu_custom_call.1} parent=1 // pred_check_branch
      %72 = sbr.rel (0) target = $region33
    $region32: #{tpu_custom_call.1} parent=1 // pred_region
      %74 = dma.done [#allocation6], 8192
    $region33: #{tpu_custom_call.1} parent=1 // pred_fallthru
      _
    // Predicated region
    $region34: #{tpu_custom_call.1} parent=1 // pred_check
      _
    $region35: #{tpu_custom_call.1} parent=1 // pred_check_branch
      %76 = sbr.rel (0) target = $region37
    $region36: #{tpu_custom_call.1} parent=1 // pred_region
      %78 = dma.done [#allocation6], 8192
    $region37: #{tpu_custom_call.1} parent=1 // pred_fallthru
      _
    // Predicated region
    $region38: #{tpu_custom_call.1} parent=1 // pred_check
      _
    $region39: #{tpu_custom_call.1} parent=1 // pred_check_branch
      %80 = sbr.rel (0) target = $region41
    $region40: #{tpu_custom_call.1} parent=1 // pred_region
      %82 = dma.done [#allocation9], 128
    $region41: #{tpu_custom_call.1} parent=1 // pred_fallthru
      _
    %v83 = vld [vmem:[#allocation2] sm:$0xff]
    %v84 = vld [vmem:[#allocation2 + $0x8] sm:$0xff]
    %v85 = vmax.f32 %v83, 0.0
    %v86 = vmax.f32 %v84, 0.0
    %v87 = vld [vmem:[#allocation5] sm:$0xff]
    %v88 = vld [vmem:[#allocation5 + $0x8] sm:$0xff]
    %v89 = vld [vmem:[#allocation5 + $0x10] sm:$0xff]
    %v90 = vld [vmem:[#allocation5 + $0x18] sm:$0xff]
    %v91 = vld [vmem:[#allocation5 + $0x20] sm:$0xff]
    %v92 = vld [vmem:[#allocation5 + $0x28] sm:$0xff]
    %v93 = vld [vmem:[#allocation5 + $0x30] sm:$0xff]
    %v94 = vld [vmem:[#allocation5 + $0x38] sm:$0xff]
    %v95 = vld [vmem:[#allocation5 + $0x40] sm:$0xff]
    %v96 = vld [vmem:[#allocation5 + $0x48] sm:$0xff]
    %v97 = vld [vmem:[#allocation5 + $0x50] sm:$0xff]
    %v98 = vld [vmem:[#allocation5 + $0x58] sm:$0xff]
    %v99 = vld [vmem:[#allocation5 + $0x60] sm:$0xff]
    %v100 = vld [vmem:[#allocation5 + $0x68] sm:$0xff]
    %v101 = vld [vmem:[#allocation5 + $0x70] sm:$0xff]
    %v102 = vld [vmem:[#allocation5 + $0x78] sm:$0xff]
    %v103 = vld [vmem:[#allocation5 + $0x80] sm:$0xff]
    %v104 = vld [vmem:[#allocation5 + $0x88] sm:$0xff]
    %v105 = vld [vmem:[#allocation5 + $0x90] sm:$0xff]
    %v106 = vld [vmem:[#allocation5 + $0x98] sm:$0xff]
    %v107 = vld [vmem:[#allocation5 + $0xa0] sm:$0xff]
    %v108 = vld [vmem:[#allocation5 + $0xa8] sm:$0xff]
    %v109 = vld [vmem:[#allocation5 + $0xb0] sm:$0xff]
    %v110 = vld [vmem:[#allocation5 + $0xb8] sm:$0xff]
    %v111 = vld [vmem:[#allocation5 + $0xc0] sm:$0xff]
    %v112 = vld [vmem:[#allocation5 + $0xc8] sm:$0xff]
    %v113 = vld [vmem:[#allocation5 + $0xd0] sm:$0xff]
    %v114 = vld [vmem:[#allocation5 + $0xd8] sm:$0xff]
    %v115 = vld [vmem:[#allocation5 + $0xe0] sm:$0xff]
    %v116 = vld [vmem:[#allocation5 + $0xe8] sm:$0xff]
    %v117 = vld [vmem:[#allocation5 + $0xf0] sm:$0xff]
    %v118 = vld [vmem:[#allocation5 + $0xf8] sm:$0xff]
    %v119 = vld [vmem:[#allocation5 + $0x100] sm:$0xff]
    %v120 = vld [vmem:[#allocation5 + $0x108] sm:$0xff]
    %v121 = vld [vmem:[#allocation5 + $0x110] sm:$0xff]
    %v122 = vld [vmem:[#allocation5 + $0x118] sm:$0xff]
    %v123 = vld [vmem:[#allocation5 + $0x120] sm:$0xff]
    %v124 = vld [vmem:[#allocation5 + $0x128] sm:$0xff]
    %v125 = vld [vmem:[#allocation5 + $0x130] sm:$0xff]
    %v126 = vld [vmem:[#allocation5 + $0x138] sm:$0xff]
    %v127 = vld [vmem:[#allocation5 + $0x140] sm:$0xff]
    %v128 = vld [vmem:[#allocation5 + $0x148] sm:$0xff]
    %v129 = vld [vmem:[#allocation5 + $0x150] sm:$0xff]
    %v130 = vld [vmem:[#allocation5 + $0x158] sm:$0xff]
    %v131 = vld [vmem:[#allocation5 + $0x160] sm:$0xff]
    %v132 = vld [vmem:[#allocation5 + $0x168] sm:$0xff]
    %v133 = vld [vmem:[#allocation5 + $0x170] sm:$0xff]
    %v134 = vld [vmem:[#allocation5 + $0x178] sm:$0xff]
    %v135 = vld [vmem:[#allocation5 + $0x180] sm:$0xff]
    %v136 = vld [vmem:[#allocation5 + $0x188] sm:$0xff]
    %v137 = vld [vmem:[#allocation5 + $0x190] sm:$0xff]
    %v138 = vld [vmem:[#allocation5 + $0x198] sm:$0xff]
    %v139 = vld [vmem:[#allocation5 + $0x1a0] sm:$0xff]
    %v140 = vld [vmem:[#allocation5 + $0x1a8] sm:$0xff]
    %v141 = vld [vmem:[#allocation5 + $0x1b0] sm:$0xff]
    %v142 = vld [vmem:[#allocation5 + $0x1b8] sm:$0xff]
    %v143 = vld [vmem:[#allocation5 + $0x1c0] sm:$0xff]
    %v144 = vld [vmem:[#allocation5 + $0x1c8] sm:$0xff]
    %v145 = vld [vmem:[#allocation5 + $0x1d0] sm:$0xff]
    %v146 = vld [vmem:[#allocation5 + $0x1d8] sm:$0xff]
    %v147 = vld [vmem:[#allocation5 + $0x1e0] sm:$0xff]
    %v148 = vld [vmem:[#allocation5 + $0x1e8] sm:$0xff]
    %v149 = vld [vmem:[#allocation5 + $0x1f0] sm:$0xff]
    %v150 = vld [vmem:[#allocation5 + $0x1f8] sm:$0xff]
    %v151 = vunpack.c.l.bf16 %v87
    %v152 = vunpack.c.h.bf16 %v87
    %v153 = vunpack.c.l.bf16 %v88
    %v154 = vunpack.c.h.bf16 %v88
    %v155 = vunpack.c.l.bf16 %v89
    %v156 = vunpack.c.h.bf16 %v89
    %v157 = vunpack.c.l.bf16 %v90
    %v158 = vunpack.c.h.bf16 %v90
    %v159 = vunpack.c.l.bf16 %v91
    %v160 = vunpack.c.h.bf16 %v91
    %v161 = vunpack.c.l.bf16 %v92
    %v162 = vunpack.c.h.bf16 %v92
    %v163 = vunpack.c.l.bf16 %v93
    %v164 = vunpack.c.h.bf16 %v93
    %v165 = vunpack.c.l.bf16 %v94
    %v166 = vunpack.c.h.bf16 %v94
    %v167 = vunpack.c.l.bf16 %v95
    %v168 = vunpack.c.h.bf16 %v95
    %v169 = vunpack.c.l.bf16 %v96
    %v170 = vunpack.c.h.bf16 %v96
    %v171 = vunpack.c.l.bf16 %v97
    %v172 = vunpack.c.h.bf16 %v97
    %v173 = vunpack.c.l.bf16 %v98
    %v174 = vunpack.c.h.bf16 %v98
    %v175 = vunpack.c.l.bf16 %v99
    %v176 = vunpack.c.h.bf16 %v99
    %v177 = vunpack.c.l.bf16 %v100
    %v178 = vunpack.c.h.bf16 %v100
    %v179 = vunpack.c.l.bf16 %v101
    %v180 = vunpack.c.h.bf16 %v101
    %v181 = vunpack.c.l.bf16 %v102
    %v182 = vunpack.c.h.bf16 %v102
    %v183 = vunpack.c.l.bf16 %v103
    %v184 = vunpack.c.h.bf16 %v103
    %v185 = vunpack.c.l.bf16 %v104
    %v186 = vunpack.c.h.bf16 %v104
    %v187 = vunpack.c.l.bf16 %v105
    %v188 = vunpack.c.h.bf16 %v105
    %v189 = vunpack.c.l.bf16 %v106
    %v190 = vunpack.c.h.bf16 %v106
    %v191 = vunpack.c.l.bf16 %v107
    %v192 = vunpack.c.h.bf16 %v107
    %v193 = vunpack.c.l.bf16 %v108
    %v194 = vunpack.c.h.bf16 %v108
    %v195 = vunpack.c.l.bf16 %v109
    %v196 = vunpack.c.h.bf16 %v109
    %v197 = vunpack.c.l.bf16 %v110
    %v198 = vunpack.c.h.bf16 %v110
    %v199 = vunpack.c.l.bf16 %v111
    %v200 = vunpack.c.h.bf16 %v111
    %v201 = vunpack.c.l.bf16 %v112
    %v202 = vunpack.c.h.bf16 %v112
    %v203 = vunpack.c.l.bf16 %v113
    %v204 = vunpack.c.h.bf16 %v113
    %v205 = vunpack.c.l.bf16 %v114
    %v206 = vunpack.c.h.bf16 %v114
    %v207 = vunpack.c.l.bf16 %v115
    %v208 = vunpack.c.h.bf16 %v115
    %v209 = vunpack.c.l.bf16 %v116
    %v210 = vunpack.c.h.bf16 %v116
    %v211 = vunpack.c.l.bf16 %v117
    %v212 = vunpack.c.h.bf16 %v117
    %v213 = vunpack.c.l.bf16 %v118
    %v214 = vunpack.c.h.bf16 %v118
    %v215 = vunpack.c.l.bf16 %v119
    %v216 = vunpack.c.h.bf16 %v119
    %v217 = vunpack.c.l.bf16 %v120
    %v218 = vunpack.c.h.bf16 %v120
    %v219 = vunpack.c.l.bf16 %v121
    %v220 = vunpack.c.h.bf16 %v121
    %v221 = vunpack.c.l.bf16 %v122
    %v222 = vunpack.c.h.bf16 %v122
    %v223 = vunpack.c.l.bf16 %v123
    %v224 = vunpack.c.h.bf16 %v123
    %v225 = vunpack.c.l.bf16 %v124
    %v226 = vunpack.c.h.bf16 %v124
    %v227 = vunpack.c.l.bf16 %v125
    %v228 = vunpack.c.h.bf16 %v125
    %v229 = vunpack.c.l.bf16 %v126
    %v230 = vunpack.c.h.bf16 %v126
    %v231 = vunpack.c.l.bf16 %v127
    %v232 = vunpack.c.h.bf16 %v127
    %v233 = vunpack.c.l.bf16 %v128
    %v234 = vunpack.c.h.bf16 %v128
    %v235 = vunpack.c.l.bf16 %v129
    %v236 = vunpack.c.h.bf16 %v129
    %v237 = vunpack.c.l.bf16 %v130
    %v238 = vunpack.c.h.bf16 %v130
    %v239 = vunpack.c.l.bf16 %v131
    %v240 = vunpack.c.h.bf16 %v131
    %v241 = vunpack.c.l.bf16 %v132
    %v242 = vunpack.c.h.bf16 %v132
    %v243 = vunpack.c.l.bf16 %v133
    %v244 = vunpack.c.h.bf16 %v133
    %v245 = vunpack.c.l.bf16 %v134
    %v246 = vunpack.c.h.bf16 %v134
    %v247 = vunpack.c.l.bf16 %v135
    %v248 = vunpack.c.h.bf16 %v135
    %v249 = vunpack.c.l.bf16 %v136
    %v250 = vunpack.c.h.bf16 %v136
    %v251 = vunpack.c.l.bf16 %v137
    %v252 = vunpack.c.h.bf16 %v137
    %v253 = vunpack.c.l.bf16 %v138
    %v254 = vunpack.c.h.bf16 %v138
    %v255 = vunpack.c.l.bf16 %v139
    %v256 = vunpack.c.h.bf16 %v139
    %v257 = vunpack.c.l.bf16 %v140
    %v258 = vunpack.c.h.bf16 %v140
    %v259 = vunpack.c.l.bf16 %v141
    %v260 = vunpack.c.h.bf16 %v141
    %v261 = vunpack.c.l.bf16 %v142
    %v262 = vunpack.c.h.bf16 %v142
    %v263 = vunpack.c.l.bf16 %v143
    %v264 = vunpack.c.h.bf16 %v143
    %v265 = vunpack.c.l.bf16 %v144
    %v266 = vunpack.c.h.bf16 %v144
    %v267 = vunpack.c.l.bf16 %v145
    %v268 = vunpack.c.h.bf16 %v145
    %v269 = vunpack.c.l.bf16 %v146
    %v270 = vunpack.c.h.bf16 %v146
    %v271 = vunpack.c.l.bf16 %v147
    %v272 = vunpack.c.h.bf16 %v147
    %v273 = vunpack.c.l.bf16 %v148
    %v274 = vunpack.c.h.bf16 %v148
    %v275 = vunpack.c.l.bf16 %v149
    %v276 = vunpack.c.h.bf16 %v149
    %v277 = vunpack.c.l.bf16 %v150
    %v278 = vunpack.c.h.bf16 %v150
    %v279 = vld [vmem:[#allocation7] sm:$0xff]
    %v280 = vld [vmem:[#allocation7 + $0x8] sm:$0xff]
    %v281 = vld [vmem:[#allocation7 + $0x10] sm:$0xff]
    %v282 = vld [vmem:[#allocation7 + $0x18] sm:$0xff]
    %v283 = vld [vmem:[#allocation7 + $0x20] sm:$0xff]
    %v284 = vld [vmem:[#allocation7 + $0x28] sm:$0xff]
    %v285 = vld [vmem:[#allocation7 + $0x30] sm:$0xff]
    %v286 = vld [vmem:[#allocation7 + $0x38] sm:$0xff]
    %v287 = vld [vmem:[#allocation7 + $0x40] sm:$0xff]
    %v288 = vld [vmem:[#allocation7 + $0x48] sm:$0xff]
    %v289 = vld [vmem:[#allocation7 + $0x50] sm:$0xff]
    %v290 = vld [vmem:[#allocation7 + $0x58] sm:$0xff]
    %v291 = vld [vmem:[#allocation7 + $0x60] sm:$0xff]
    %v292 = vld [vmem:[#allocation7 + $0x68] sm:$0xff]
    %v293 = vld [vmem:[#allocation7 + $0x70] sm:$0xff]
    %v294 = vld [vmem:[#allocation7 + $0x78] sm:$0xff]
    %v295 = vld [vmem:[#allocation7 + $0x80] sm:$0xff]
    %v296 = vld [vmem:[#allocation7 + $0x88] sm:$0xff]
    %v297 = vld [vmem:[#allocation7 + $0x90] sm:$0xff]
    %v298 = vld [vmem:[#allocation7 + $0x98] sm:$0xff]
    %v299 = vld [vmem:[#allocation7 + $0xa0] sm:$0xff]
    %v300 = vld [vmem:[#allocation7 + $0xa8] sm:$0xff]
    %v301 = vld [vmem:[#allocation7 + $0xb0] sm:$0xff]
    %v302 = vld [vmem:[#allocation7 + $0xb8] sm:$0xff]
    %v303 = vld [vmem:[#allocation7 + $0xc0] sm:$0xff]
    %v304 = vld [vmem:[#allocation7 + $0xc8] sm:$0xff]
    %v305 = vld [vmem:[#allocation7 + $0xd0] sm:$0xff]
    %v306 = vld [vmem:[#allocation7 + $0xd8] sm:$0xff]
    %v307 = vld [vmem:[#allocation7 + $0xe0] sm:$0xff]
    %v308 = vld [vmem:[#allocation7 + $0xe8] sm:$0xff]
    %v309 = vld [vmem:[#allocation7 + $0xf0] sm:$0xff]
    %v310 = vld [vmem:[#allocation7 + $0xf8] sm:$0xff]
    %v311 = vld [vmem:[#allocation7 + $0x100] sm:$0xff]
    %v312 = vld [vmem:[#allocation7 + $0x108] sm:$0xff]
    %v313 = vld [vmem:[#allocation7 + $0x110] sm:$0xff]
    %v314 = vld [vmem:[#allocation7 + $0x118] sm:$0xff]
    %v315 = vld [vmem:[#allocation7 + $0x120] sm:$0xff]
    %v316 = vld [vmem:[#allocation7 + $0x128] sm:$0xff]
    %v317 = vld [vmem:[#allocation7 + $0x130] sm:$0xff]
    %v318 = vld [vmem:[#allocation7 + $0x138] sm:$0xff]
    %v319 = vld [vmem:[#allocation7 + $0x140] sm:$0xff]
    %v320 = vld [vmem:[#allocation7 + $0x148] sm:$0xff]
    %v321 = vld [vmem:[#allocation7 + $0x150] sm:$0xff]
    %v322 = vld [vmem:[#allocation7 + $0x158] sm:$0xff]
    %v323 = vld [vmem:[#allocation7 + $0x160] sm:$0xff]
    %v324 = vld [vmem:[#allocation7 + $0x168] sm:$0xff]
    %v325 = vld [vmem:[#allocation7 + $0x170] sm:$0xff]
    %v326 = vld [vmem:[#allocation7 + $0x178] sm:$0xff]
    %v327 = vld [vmem:[#allocation7 + $0x180] sm:$0xff]
    %v328 = vld [vmem:[#allocation7 + $0x188] sm:$0xff]
    %v329 = vld [vmem:[#allocation7 + $0x190] sm:$0xff]
    %v330 = vld [vmem:[#allocation7 + $0x198] sm:$0xff]
    %v331 = vld [vmem:[#allocation7 + $0x1a0] sm:$0xff]
    %v332 = vld [vmem:[#allocation7 + $0x1a8] sm:$0xff]
    %v333 = vld [vmem:[#allocation7 + $0x1b0] sm:$0xff]
    %v334 = vld [vmem:[#allocation7 + $0x1b8] sm:$0xff]
    %v335 = vld [vmem:[#allocation7 + $0x1c0] sm:$0xff]
    %v336 = vld [vmem:[#allocation7 + $0x1c8] sm:$0xff]
    %v337 = vld [vmem:[#allocation7 + $0x1d0] sm:$0xff]
    %v338 = vld [vmem:[#allocation7 + $0x1d8] sm:$0xff]
    %v339 = vld [vmem:[#allocation7 + $0x1e0] sm:$0xff]
    %v340 = vld [vmem:[#allocation7 + $0x1e8] sm:$0xff]
    %v341 = vld [vmem:[#allocation7 + $0x1f0] sm:$0xff]
    %v342 = vld [vmem:[#allocation7 + $0x1f8] sm:$0xff]
    %v343 = vunpack.c.l.bf16 %v279
    %v344 = vunpack.c.h.bf16 %v279
    %v345 = vunpack.c.l.bf16 %v280
    %v346 = vunpack.c.h.bf16 %v280
    %v347 = vunpack.c.l.bf16 %v281
    %v348 = vunpack.c.h.bf16 %v281
    %v349 = vunpack.c.l.bf16 %v282
    %v350 = vunpack.c.h.bf16 %v282
    %v351 = vunpack.c.l.bf16 %v283
    %v352 = vunpack.c.h.bf16 %v283
    %v353 = vunpack.c.l.bf16 %v284
    %v354 = vunpack.c.h.bf16 %v284
    %v355 = vunpack.c.l.bf16 %v285
    %v356 = vunpack.c.h.bf16 %v285
    %v357 = vunpack.c.l.bf16 %v286
    %v358 = vunpack.c.h.bf16 %v286
    %v359 = vunpack.c.l.bf16 %v287
    %v360 = vunpack.c.h.bf16 %v287
    %v361 = vunpack.c.l.bf16 %v288
    %v362 = vunpack.c.h.bf16 %v288
    %v363 = vunpack.c.l.bf16 %v289
    %v364 = vunpack.c.h.bf16 %v289
    %v365 = vunpack.c.l.bf16 %v290
    %v366 = vunpack.c.h.bf16 %v290
    %v367 = vunpack.c.l.bf16 %v291
    %v368 = vunpack.c.h.bf16 %v291
    %v369 = vunpack.c.l.bf16 %v292
    %v370 = vunpack.c.h.bf16 %v292
    %v371 = vunpack.c.l.bf16 %v293
    %v372 = vunpack.c.h.bf16 %v293
    %v373 = vunpack.c.l.bf16 %v294
    %v374 = vunpack.c.h.bf16 %v294
    %v375 = vunpack.c.l.bf16 %v295
    %v376 = vunpack.c.h.bf16 %v295
    %v377 = vunpack.c.l.bf16 %v296
    %v378 = vunpack.c.h.bf16 %v296
    %v379 = vunpack.c.l.bf16 %v297
    %v380 = vunpack.c.h.bf16 %v297
    %v381 = vunpack.c.l.bf16 %v298
    %v382 = vunpack.c.h.bf16 %v298
    %v383 = vunpack.c.l.bf16 %v299
    %v384 = vunpack.c.h.bf16 %v299
    %v385 = vunpack.c.l.bf16 %v300
    %v386 = vunpack.c.h.bf16 %v300
    %v387 = vunpack.c.l.bf16 %v301
    %v388 = vunpack.c.h.bf16 %v301
    %v389 = vunpack.c.l.bf16 %v302
    %v390 = vunpack.c.h.bf16 %v302
    %v391 = vunpack.c.l.bf16 %v303
    %v392 = vunpack.c.h.bf16 %v303
    %v393 = vunpack.c.l.bf16 %v304
    %v394 = vunpack.c.h.bf16 %v304
    %v395 = vunpack.c.l.bf16 %v305
    %v396 = vunpack.c.h.bf16 %v305
    %v397 = vunpack.c.l.bf16 %v306
    %v398 = vunpack.c.h.bf16 %v306
    %v399 = vunpack.c.l.bf16 %v307
    %v400 = vunpack.c.h.bf16 %v307
    %v401 = vunpack.c.l.bf16 %v308
    %v402 = vunpack.c.h.bf16 %v308
    %v403 = vunpack.c.l.bf16 %v309
    %v404 = vunpack.c.h.bf16 %v309
    %v405 = vunpack.c.l.bf16 %v310
    %v406 = vunpack.c.h.bf16 %v310
    %v407 = vunpack.c.l.bf16 %v311
    %v408 = vunpack.c.h.bf16 %v311
    %v409 = vunpack.c.l.bf16 %v312
    %v410 = vunpack.c.h.bf16 %v312
    %v411 = vunpack.c.l.bf16 %v313
    %v412 = vunpack.c.h.bf16 %v313
    %v413 = vunpack.c.l.bf16 %v314
    %v414 = vunpack.c.h.bf16 %v314
    %v415 = vunpack.c.l.bf16 %v315
    %v416 = vunpack.c.h.bf16 %v315
    %v417 = vunpack.c.l.bf16 %v316
    %v418 = vunpack.c.h.bf16 %v316
    %v419 = vunpack.c.l.bf16 %v317
    %v420 = vunpack.c.h.bf16 %v317
    %v421 = vunpack.c.l.bf16 %v318
    %v422 = vunpack.c.h.bf16 %v318
    %v423 = vunpack.c.l.bf16 %v319
    %v424 = vunpack.c.h.bf16 %v319
    %v425 = vunpack.c.l.bf16 %v320
    %v426 = vunpack.c.h.bf16 %v320
    %v427 = vunpack.c.l.bf16 %v321
    %v428 = vunpack.c.h.bf16 %v321
    %v429 = vunpack.c.l.bf16 %v322
    %v430 = vunpack.c.h.bf16 %v322
    %v431 = vunpack.c.l.bf16 %v323
    %v432 = vunpack.c.h.bf16 %v323
    %v433 = vunpack.c.l.bf16 %v324
    %v434 = vunpack.c.h.bf16 %v324
    %v435 = vunpack.c.l.bf16 %v325
    %v436 = vunpack.c.h.bf16 %v325
    %v437 = vunpack.c.l.bf16 %v326
    %v438 = vunpack.c.h.bf16 %v326
    %v439 = vunpack.c.l.bf16 %v327
    %v440 = vunpack.c.h.bf16 %v327
    %v441 = vunpack.c.l.bf16 %v328
    %v442 = vunpack.c.h.bf16 %v328
    %v443 = vunpack.c.l.bf16 %v329
    %v444 = vunpack.c.h.bf16 %v329
    %v445 = vunpack.c.l.bf16 %v330
    %v446 = vunpack.c.h.bf16 %v330
    %v447 = vunpack.c.l.bf16 %v331
    %v448 = vunpack.c.h.bf16 %v331
    %v449 = vunpack.c.l.bf16 %v332
    %v450 = vunpack.c.h.bf16 %v332
    %v451 = vunpack.c.l.bf16 %v333
    %v452 = vunpack.c.h.bf16 %v333
    %v453 = vunpack.c.l.bf16 %v334
    %v454 = vunpack.c.h.bf16 %v334
    %v455 = vunpack.c.l.bf16 %v335
    %v456 = vunpack.c.h.bf16 %v335
    %v457 = vunpack.c.l.bf16 %v336
    %v458 = vunpack.c.h.bf16 %v336
    %v459 = vunpack.c.l.bf16 %v337
    %v460 = vunpack.c.h.bf16 %v337
    %v461 = vunpack.c.l.bf16 %v338
    %v462 = vunpack.c.h.bf16 %v338
    %v463 = vunpack.c.l.bf16 %v339
    %v464 = vunpack.c.h.bf16 %v339
    %v465 = vunpack.c.l.bf16 %v340
    %v466 = vunpack.c.h.bf16 %v340
    %v467 = vunpack.c.l.bf16 %v341
    %v468 = vunpack.c.h.bf16 %v341
    %v469 = vunpack.c.l.bf16 %v342
    %v470 = vunpack.c.h.bf16 %v342
    %v471 = vmul.f32 %v343, 2.0
    %v472 = vmul.f32 %v344, 2.0
    %v473 = vmul.f32 %v345, 2.0
    %v474 = vmul.f32 %v346, 2.0
    %v475 = vmul.f32 %v347, 2.0
    %v476 = vmul.f32 %v348, 2.0
    %v477 = vmul.f32 %v349, 2.0
    %v478 = vmul.f32 %v350, 2.0
    %v479 = vmul.f32 %v351, 2.0
    %v480 = vmul.f32 %v352, 2.0
    %v481 = vmul.f32 %v353, 2.0
    %v482 = vmul.f32 %v354, 2.0
    %v483 = vmul.f32 %v355, 2.0
    %v484 = vmul.f32 %v356, 2.0
    %v485 = vmul.f32 %v357, 2.0
    %v486 = vmul.f32 %v358, 2.0
    %v487 = vmul.f32 %v359, 2.0
    %v488 = vmul.f32 %v360, 2.0
    %v489 = vmul.f32 %v361, 2.0
    %v490 = vmul.f32 %v362, 2.0
    %v491 = vmul.f32 %v363, 2.0
    %v492 = vmul.f32 %v364, 2.0
    %v493 = vmul.f32 %v365, 2.0
    %v494 = vmul.f32 %v366, 2.0
    %v495 = vmul.f32 %v367, 2.0
    %v496 = vmul.f32 %v368, 2.0
    %v497 = vmul.f32 %v369, 2.0
    %v498 = vmul.f32 %v370, 2.0
    %v499 = vmul.f32 %v371, 2.0
    %v500 = vmul.f32 %v372, 2.0
    %v501 = vmul.f32 %v373, 2.0
    %v502 = vmul.f32 %v374, 2.0
    %v503 = vmul.f32 %v375, 2.0
    %v504 = vmul.f32 %v376, 2.0
    %v505 = vmul.f32 %v377, 2.0
    %v506 = vmul.f32 %v378, 2.0
    %v507 = vmul.f32 %v379, 2.0
    %v508 = vmul.f32 %v380, 2.0
    %v509 = vmul.f32 %v381, 2.0
    %v510 = vmul.f32 %v382, 2.0
    %v511 = vmul.f32 %v383, 2.0
    %v512 = vmul.f32 %v384, 2.0
    %v513 = vmul.f32 %v385, 2.0
    %v514 = vmul.f32 %v386, 2.0
    %v515 = vmul.f32 %v387, 2.0
    %v516 = vmul.f32 %v388, 2.0
    %v517 = vmul.f32 %v389, 2.0
    %v518 = vmul.f32 %v390, 2.0
    %v519 = vmul.f32 %v391, 2.0
    %v520 = vmul.f32 %v392, 2.0
    %v521 = vmul.f32 %v393, 2.0
    %v522 = vmul.f32 %v394, 2.0
    %v523 = vmul.f32 %v395, 2.0
    %v524 = vmul.f32 %v396, 2.0
    %v525 = vmul.f32 %v397, 2.0
    %v526 = vmul.f32 %v398, 2.0
    %v527 = vmul.f32 %v399, 2.0
    %v528 = vmul.f32 %v400, 2.0
    %v529 = vmul.f32 %v401, 2.0
    %v530 = vmul.f32 %v402, 2.0
    %v531 = vmul.f32 %v403, 2.0
    %v532 = vmul.f32 %v404, 2.0
    %v533 = vmul.f32 %v405, 2.0
    %v534 = vmul.f32 %v406, 2.0
    %v535 = vmul.f32 %v407, 2.0
    %v536 = vmul.f32 %v408, 2.0
    %v537 = vmul.f32 %v409, 2.0
    %v538 = vmul.f32 %v410, 2.0
    %v539 = vmul.f32 %v411, 2.0
    %v540 = vmul.f32 %v412, 2.0
    %v541 = vmul.f32 %v413, 2.0
    %v542 = vmul.f32 %v414, 2.0
    %v543 = vmul.f32 %v415, 2.0
    %v544 = vmul.f32 %v416, 2.0
    %v545 = vmul.f32 %v417, 2.0
    %v546 = vmul.f32 %v418, 2.0
    %v547 = vmul.f32 %v419, 2.0
    %v548 = vmul.f32 %v420, 2.0
    %v549 = vmul.f32 %v421, 2.0
    %v550 = vmul.f32 %v422, 2.0
    %v551 = vmul.f32 %v423, 2.0
    %v552 = vmul.f32 %v424, 2.0
    %v553 = vmul.f32 %v425, 2.0
    %v554 = vmul.f32 %v426, 2.0
    %v555 = vmul.f32 %v427, 2.0
    %v556 = vmul.f32 %v428, 2.0
    %v557 = vmul.f32 %v429, 2.0
    %v558 = vmul.f32 %v430, 2.0
    %v559 = vmul.f32 %v431, 2.0
    %v560 = vmul.f32 %v432, 2.0
    %v561 = vmul.f32 %v433, 2.0
    %v562 = vmul.f32 %v434, 2.0
    %v563 = vmul.f32 %v435, 2.0
    %v564 = vmul.f32 %v436, 2.0
    %v565 = vmul.f32 %v437, 2.0
    %v566 = vmul.f32 %v438, 2.0
    %v567 = vmul.f32 %v439, 2.0
    %v568 = vmul.f32 %v440, 2.0
    %v569 = vmul.f32 %v441, 2.0
    %v570 = vmul.f32 %v442, 2.0
    %v571 = vmul.f32 %v443, 2.0
    %v572 = vmul.f32 %v444, 2.0
    %v573 = vmul.f32 %v445, 2.0
    %v574 = vmul.f32 %v446, 2.0
    %v575 = vmul.f32 %v447, 2.0
    %v576 = vmul.f32 %v448, 2.0
    %v577 = vmul.f32 %v449, 2.0
    %v578 = vmul.f32 %v450, 2.0
    %v579 = vmul.f32 %v451, 2.0
    %v580 = vmul.f32 %v452, 2.0
    %v581 = vmul.f32 %v453, 2.0
    %v582 = vmul.f32 %v454, 2.0
    %v583 = vmul.f32 %v455, 2.0
    %v584 = vmul.f32 %v456, 2.0
    %v585 = vmul.f32 %v457, 2.0
    %v586 = vmul.f32 %v458, 2.0
    %v587 = vmul.f32 %v459, 2.0
    %v588 = vmul.f32 %v460, 2.0
    %v589 = vmul.f32 %v461, 2.0
    %v590 = vmul.f32 %v462, 2.0
    %v591 = vmul.f32 %v463, 2.0
    %v592 = vmul.f32 %v464, 2.0
    %v593 = vmul.f32 %v465, 2.0
    %v594 = vmul.f32 %v466, 2.0
    %v595 = vmul.f32 %v467, 2.0
    %v596 = vmul.f32 %v468, 2.0
    %v597 = vmul.f32 %v469, 2.0
    %v598 = vmul.f32 %v470, 2.0
    %v599 = vmul.f32 %v471, 1.442695
    %v600 = vpow.pop %v599
    %v601 = vmul.f32 %v472, 1.442695
    %v602 = vpow.pop %v601
    %v603 = vmul.f32 %v473, 1.442695
    %v604 = vpow.pop %v603
    %v605 = vmul.f32 %v474, 1.442695
    %v606 = vpow.pop %v605
    %v607 = vmul.f32 %v475, 1.442695
    %v608 = vpow.pop %v607
    %v609 = vmul.f32 %v476, 1.442695
    %v610 = vpow.pop %v609
    %v611 = vmul.f32 %v477, 1.442695
    %v612 = vpow.pop %v611
    %v613 = vmul.f32 %v478, 1.442695
    %v614 = vpow.pop %v613
    %v615 = vmul.f32 %v479, 1.442695
    %v616 = vpow.pop %v615
    %v617 = vmul.f32 %v480, 1.442695
    %v618 = vpow.pop %v617
    %v619 = vmul.f32 %v481, 1.442695
    %v620 = vpow.pop %v619
    %v621 = vmul.f32 %v482, 1.442695
    %v622 = vpow.pop %v621
    %v623 = vmul.f32 %v483, 1.442695
    %v624 = vpow.pop %v623
    %v625 = vmul.f32 %v484, 1.442695
    %v626 = vpow.pop %v625
    %v627 = vmul.f32 %v485, 1.442695
    %v628 = vpow.pop %v627
    %v629 = vmul.f32 %v486, 1.442695
    %v630 = vpow.pop %v629
    %v631 = vmul.f32 %v487, 1.442695
    %v632 = vpow.pop %v631
    %v633 = vmul.f32 %v488, 1.442695
    %v634 = vpow.pop %v633
    %v635 = vmul.f32 %v489, 1.442695
    %v636 = vpow.pop %v635
    %v637 = vmul.f32 %v490, 1.442695
    %v638 = vpow.pop %v637
    %v639 = vmul.f32 %v491, 1.442695
    %v640 = vpow.pop %v639
    %v641 = vmul.f32 %v492, 1.442695
    %v642 = vpow.pop %v641
    %v643 = vmul.f32 %v493, 1.442695
    %v644 = vpow.pop %v643
    %v645 = vmul.f32 %v494, 1.442695
    %v646 = vpow.pop %v645
    %v647 = vmul.f32 %v495, 1.442695
    %v648 = vpow.pop %v647
    %v649 = vmul.f32 %v496, 1.442695
    %v650 = vpow.pop %v649
    %v651 = vmul.f32 %v497, 1.442695
    %v652 = vpow.pop %v651
    %v653 = vmul.f32 %v498, 1.442695
    %v654 = vpow.pop %v653
    %v655 = vmul.f32 %v499, 1.442695
    %v656 = vpow.pop %v655
    %v657 = vmul.f32 %v500, 1.442695
    %v658 = vpow.pop %v657
    %v659 = vmul.f32 %v501, 1.442695
    %v660 = vpow.pop %v659
    %v661 = vmul.f32 %v502, 1.442695
    %v662 = vpow.pop %v661
    %v663 = vmul.f32 %v503, 1.442695
    %v664 = vpow.pop %v663
    %v665 = vmul.f32 %v504, 1.442695
    %v666 = vpow.pop %v665
    %v667 = vmul.f32 %v505, 1.442695
    %v668 = vpow.pop %v667
    %v669 = vmul.f32 %v506, 1.442695
    %v670 = vpow.pop %v669
    %v671 = vmul.f32 %v507, 1.442695
    %v672 = vpow.pop %v671
    %v673 = vmul.f32 %v508, 1.442695
    %v674 = vpow.pop %v673
    %v675 = vmul.f32 %v509, 1.442695
    %v676 = vpow.pop %v675
    %v677 = vmul.f32 %v510, 1.442695
    %v678 = vpow.pop %v677
    %v679 = vmul.f32 %v511, 1.442695
    %v680 = vpow.pop %v679
    %v681 = vmul.f32 %v512, 1.442695
    %v682 = vpow.pop %v681
    %v683 = vmul.f32 %v513, 1.442695
    %v684 = vpow.pop %v683
    %v685 = vmul.f32 %v514, 1.442695
    %v686 = vpow.pop %v685
    %v687 = vmul.f32 %v515, 1.442695
    %v688 = vpow.pop %v687
    %v689 = vmul.f32 %v516, 1.442695
    %v690 = vpow.pop %v689
    %v691 = vmul.f32 %v517, 1.442695
    %v692 = vpow.pop %v691
    %v693 = vmul.f32 %v518, 1.442695
    %v694 = vpow.pop %v693
    %v695 = vmul.f32 %v519, 1.442695
    %v696 = vpow.pop %v695
    %v697 = vmul.f32 %v520, 1.442695
    %v698 = vpow.pop %v697
    %v699 = vmul.f32 %v521, 1.442695
    %v700 = vpow.pop %v699
    %v701 = vmul.f32 %v522, 1.442695
    %v702 = vpow.pop %v701
    %v703 = vmul.f32 %v523, 1.442695
    %v704 = vpow.pop %v703
    %v705 = vmul.f32 %v524, 1.442695
    %v706 = vpow.pop %v705
    %v707 = vmul.f32 %v525, 1.442695
    %v708 = vpow.pop %v707
    %v709 = vmul.f32 %v526, 1.442695
    %v710 = vpow.pop %v709
    %v711 = vmul.f32 %v527, 1.442695
    %v712 = vpow.pop %v711
    %v713 = vmul.f32 %v528, 1.442695
    %v714 = vpow.pop %v713
    %v715 = vmul.f32 %v529, 1.442695
    %v716 = vpow.pop %v715
    %v717 = vmul.f32 %v530, 1.442695
    %v718 = vpow.pop %v717
    %v719 = vmul.f32 %v531, 1.442695
    %v720 = vpow.pop %v719
    %v721 = vmul.f32 %v532, 1.442695
    %v722 = vpow.pop %v721
    %v723 = vmul.f32 %v533, 1.442695
    %v724 = vpow.pop %v723
    %v725 = vmul.f32 %v534, 1.442695
    %v726 = vpow.pop %v725
    %v727 = vmul.f32 %v535, 1.442695
    %v728 = vpow.pop %v727
    %v729 = vmul.f32 %v536, 1.442695
    %v730 = vpow.pop %v729
    %v731 = vmul.f32 %v537, 1.442695
    %v732 = vpow.pop %v731
    %v733 = vmul.f32 %v538, 1.442695
    %v734 = vpow.pop %v733
    %v735 = vmul.f32 %v539, 1.442695
    %v736 = vpow.pop %v735
    %v737 = vmul.f32 %v540, 1.442695
    %v738 = vpow.pop %v737
    %v739 = vmul.f32 %v541, 1.442695
    %v740 = vpow.pop %v739
    %v741 = vmul.f32 %v542, 1.442695
    %v742 = vpow.pop %v741
    %v743 = vmul.f32 %v543, 1.442695
    %v744 = vpow.pop %v743
    %v745 = vmul.f32 %v544, 1.442695
    %v746 = vpow.pop %v745
    %v747 = vmul.f32 %v545, 1.442695
    %v748 = vpow.pop %v747
    %v749 = vmul.f32 %v546, 1.442695
    %v750 = vpow.pop %v749
    %v751 = vmul.f32 %v547, 1.442695
    %v752 = vpow.pop %v751
    %v753 = vmul.f32 %v548, 1.442695
    %v754 = vpow.pop %v753
    %v755 = vmul.f32 %v549, 1.442695
    %v756 = vpow.pop %v755
    %v757 = vmul.f32 %v550, 1.442695
    %v758 = vpow.pop %v757
    %v759 = vmul.f32 %v551, 1.442695
    %v760 = vpow.pop %v759
    %v761 = vmul.f32 %v552, 1.442695
    %v762 = vpow.pop %v761
    %v763 = vmul.f32 %v553, 1.442695
    %v764 = vpow.pop %v763
    %v765 = vmul.f32 %v554, 1.442695
    %v766 = vpow.pop %v765
    %v767 = vmul.f32 %v555, 1.442695
    %v768 = vpow.pop %v767
    %v769 = vmul.f32 %v556, 1.442695
    %v770 = vpow.pop %v769
    %v771 = vmul.f32 %v557, 1.442695
    %v772 = vpow.pop %v771
    %v773 = vmul.f32 %v558, 1.442695
    %v774 = vpow.pop %v773
    %v775 = vmul.f32 %v559, 1.442695
    %v776 = vpow.pop %v775
    %v777 = vmul.f32 %v560, 1.442695
    %v778 = vpow.pop %v777
    %v779 = vmul.f32 %v561, 1.442695
    %v780 = vpow.pop %v779
    %v781 = vmul.f32 %v562, 1.442695
    %v782 = vpow.pop %v781
    %v783 = vmul.f32 %v563, 1.442695
    %v784 = vpow.pop %v783
    %v785 = vmul.f32 %v564, 1.442695
    %v786 = vpow.pop %v785
    %v787 = vmul.f32 %v565, 1.442695
    %v788 = vpow.pop %v787
    %v789 = vmul.f32 %v566, 1.442695
    %v790 = vpow.pop %v789
    %v791 = vmul.f32 %v567, 1.442695
    %v792 = vpow.pop %v791
    %v793 = vmul.f32 %v568, 1.442695
    %v794 = vpow.pop %v793
    %v795 = vmul.f32 %v569, 1.442695
    %v796 = vpow.pop %v795
    %v797 = vmul.f32 %v570, 1.442695
    %v798 = vpow.pop %v797
    %v799 = vmul.f32 %v571, 1.442695
    %v800 = vpow.pop %v799
    %v801 = vmul.f32 %v572, 1.442695
    %v802 = vpow.pop %v801
    %v803 = vmul.f32 %v573, 1.442695
    %v804 = vpow.pop %v803
    %v805 = vmul.f32 %v574, 1.442695
    %v806 = vpow.pop %v805
    %v807 = vmul.f32 %v575, 1.442695
    %v808 = vpow.pop %v807
    %v809 = vmul.f32 %v576, 1.442695
    %v810 = vpow.pop %v809
    %v811 = vmul.f32 %v577, 1.442695
    %v812 = vpow.pop %v811
    %v813 = vmul.f32 %v578, 1.442695
    %v814 = vpow.pop %v813
    %v815 = vmul.f32 %v579, 1.442695
    %v816 = vpow.pop %v815
    %v817 = vmul.f32 %v580, 1.442695
    %v818 = vpow.pop %v817
    %v819 = vmul.f32 %v581, 1.442695
    %v820 = vpow.pop %v819
    %v821 = vmul.f32 %v582, 1.442695
    %v822 = vpow.pop %v821
    %v823 = vmul.f32 %v583, 1.442695
    %v824 = vpow.pop %v823
    %v825 = vmul.f32 %v584, 1.442695
    %v826 = vpow.pop %v825
    %v827 = vmul.f32 %v585, 1.442695
    %v828 = vpow.pop %v827
    %v829 = vmul.f32 %v586, 1.442695
    %v830 = vpow.pop %v829
    %v831 = vmul.f32 %v587, 1.442695
    %v832 = vpow.pop %v831
    %v833 = vmul.f32 %v588, 1.442695
    %v834 = vpow.pop %v833
    %v835 = vmul.f32 %v589, 1.442695
    %v836 = vpow.pop %v835
    %v837 = vmul.f32 %v590, 1.442695
    %v838 = vpow.pop %v837
    %v839 = vmul.f32 %v591, 1.442695
    %v840 = vpow.pop %v839
    %v841 = vmul.f32 %v592, 1.442695
    %v842 = vpow.pop %v841
    %v843 = vmul.f32 %v593, 1.442695
    %v844 = vpow.pop %v843
    %v845 = vmul.f32 %v594, 1.442695
    %v846 = vpow.pop %v845
    %v847 = vmul.f32 %v595, 1.442695
    %v848 = vpow.pop %v847
    %v849 = vmul.f32 %v596, 1.442695
    %v850 = vpow.pop %v849
    %v851 = vmul.f32 %v597, 1.442695
    %v852 = vpow.pop %v851
    %v853 = vmul.f32 %v598, 1.442695
    %v854 = vpow.pop %v853
    %v855 = vld [vmem:[%s3] sm:$0x1]
    %v857 = vperm.slane %v855, 0
    %861 = vst [vmem:[#allocation1] ss:$4 sm:$0xff] %v85
    %s862 = scalar_lea.vmem [#allocation1], 32
    %863 = vst [vmem:[%s862] ss:$4 sm:$0xff] %v86
    %v864 = vld.sshfl [vmem:[#allocation1] sm:$0xff pattern:$0x73625140]
    %v865 = vld.sshfl [vmem:[#allocation1 + $0x8] sm:$0xff pattern:$0x73625140]
    %v866 = vld.sshfl [vmem:[#allocation1 + $0x10] sm:$0xff pattern:$0x73625140]
    %v867 = vld.sshfl [vmem:[#allocation1 + $0x18] sm:$0xff pattern:$0x73625140]
    %v868 = vld.sshfl [vmem:[#allocation1 + $0x20] sm:$0xff pattern:$0x73625140]
    %v869 = vld.sshfl [vmem:[#allocation1 + $0x28] sm:$0xff pattern:$0x73625140]
    %v870 = vld.sshfl [vmem:[#allocation1 + $0x30] sm:$0xff pattern:$0x73625140]
    %v871 = vld.sshfl [vmem:[#allocation1 + $0x38] sm:$0xff pattern:$0x73625140]
    %880 = vmatpush.xpose.msra.mxu0 %v271
    %881 = vmatpush.xpose.msra.mxu0 %v263
    %882 = vmatpush.xpose.msra.mxu0 %v255
    %883 = vmatpush.xpose.msra.mxu0 %v247
    %884 = vmatpush.xpose.msra.mxu0 %v239
    %885 = vmatpush.xpose.msra.mxu0 %v231
    %886 = vmatpush.xpose.msra.mxu0 %v223
    %887 = vmatpush.xpose.msra.mxu0 %v215
    %888 = vmatpush.xpose.msra.mxu0 %v207
    %889 = vmatpush.xpose.msra.mxu0 %v199
    %890 = vmatpush.xpose.msra.mxu0 %v191
    %891 = vmatpush.xpose.msra.mxu0 %v183
    %892 = vmatpush.xpose.msra.mxu0 %v175
    %893 = vmatpush.xpose.msra.mxu0 %v167
    %894 = vmatpush.xpose.msra.mxu0 %v159
    %895 = vmatpush.xpose.msra.mxu0 %v151
    %896 = vmatmul.f32.gmra.mxu0 %v864
    %v897 = vpop.f32.mrf.mxu0
    %v898 = vadd.f32 %v857, %v897
    %899 = vdwg.mxu0
    %900 = vmatpush.xpose.msra.mxu0 %v272
    %901 = vmatpush.xpose.msra.mxu0 %v264
    %902 = vmatpush.xpose.msra.mxu0 %v256
    %903 = vmatpush.xpose.msra.mxu0 %v248
    %904 = vmatpush.xpose.msra.mxu0 %v240
    %905 = vmatpush.xpose.msra.mxu0 %v232
    %906 = vmatpush.xpose.msra.mxu0 %v224
    %907 = vmatpush.xpose.msra.mxu0 %v216
    %908 = vmatpush.xpose.msra.mxu0 %v208
    %909 = vmatpush.xpose.msra.mxu0 %v200
    %910 = vmatpush.xpose.msra.mxu0 %v192
    %911 = vmatpush.xpose.msra.mxu0 %v184
    %912 = vmatpush.xpose.msra.mxu0 %v176
    %913 = vmatpush.xpose.msra.mxu0 %v168
    %914 = vmatpush.xpose.msra.mxu0 %v160
    %915 = vmatpush.xpose.msra.mxu0 %v152
    %916 = vmatmul.f32.gmra.mxu0 %v865
    %v917 = vpop.f32.mrf.mxu0
    %v918 = vadd.f32 %v898, %v917
    %919 = vdwg.mxu0
    %920 = vmatpush.xpose.msra.mxu0 %v273
    %921 = vmatpush.xpose.msra.mxu0 %v265
    %922 = vmatpush.xpose.msra.mxu0 %v257
    %923 = vmatpush.xpose.msra.mxu0 %v249
    %924 = vmatpush.xpose.msra.mxu0 %v241
    %925 = vmatpush.xpose.msra.mxu0 %v233
    %926 = vmatpush.xpose.msra.mxu0 %v225
    %927 = vmatpush.xpose.msra.mxu0 %v217
    %928 = vmatpush.xpose.msra.mxu0 %v209
    %929 = vmatpush.xpose.msra.mxu0 %v201
    %930 = vmatpush.xpose.msra.mxu0 %v193
    %931 = vmatpush.xpose.msra.mxu0 %v185
    %932 = vmatpush.xpose.msra.mxu0 %v177
    %933 = vmatpush.xpose.msra.mxu0 %v169
    %934 = vmatpush.xpose.msra.mxu0 %v161
    %935 = vmatpush.xpose.msra.mxu0 %v153
    %936 = vmatmul.f32.gmra.mxu0 %v866
    %v937 = vpop.f32.mrf.mxu0
    %v938 = vadd.f32 %v918, %v937
    %939 = vdwg.mxu0
    %940 = vmatpush.xpose.msra.mxu0 %v274
    %941 = vmatpush.xpose.msra.mxu0 %v266
    %942 = vmatpush.xpose.msra.mxu0 %v258
    %943 = vmatpush.xpose.msra.mxu0 %v250
    %944 = vmatpush.xpose.msra.mxu0 %v242
    %945 = vmatpush.xpose.msra.mxu0 %v234
    %946 = vmatpush.xpose.msra.mxu0 %v226
    %947 = vmatpush.xpose.msra.mxu0 %v218
    %948 = vmatpush.xpose.msra.mxu0 %v210
    %949 = vmatpush.xpose.msra.mxu0 %v202
    %950 = vmatpush.xpose.msra.mxu0 %v194
    %951 = vmatpush.xpose.msra.mxu0 %v186
    %952 = vmatpush.xpose.msra.mxu0 %v178
    %953 = vmatpush.xpose.msra.mxu0 %v170
    %954 = vmatpush.xpose.msra.mxu0 %v162
    %955 = vmatpush.xpose.msra.mxu0 %v154
    %956 = vmatmul.f32.gmra.mxu0 %v867
    %v957 = vpop.f32.mrf.mxu0
    %v958 = vadd.f32 %v938, %v957
    %959 = vdwg.mxu0
    %960 = vmatpush.xpose.msra.mxu0 %v275
    %961 = vmatpush.xpose.msra.mxu0 %v267
    %962 = vmatpush.xpose.msra.mxu0 %v259
    %963 = vmatpush.xpose.msra.mxu0 %v251
    %964 = vmatpush.xpose.msra.mxu0 %v243
    %965 = vmatpush.xpose.msra.mxu0 %v235
    %966 = vmatpush.xpose.msra.mxu0 %v227
    %967 = vmatpush.xpose.msra.mxu0 %v219
    %968 = vmatpush.xpose.msra.mxu0 %v211
    %969 = vmatpush.xpose.msra.mxu0 %v203
    %970 = vmatpush.xpose.msra.mxu0 %v195
    %971 = vmatpush.xpose.msra.mxu0 %v187
    %972 = vmatpush.xpose.msra.mxu0 %v179
    %973 = vmatpush.xpose.msra.mxu0 %v171
    %974 = vmatpush.xpose.msra.mxu0 %v163
    %975 = vmatpush.xpose.msra.mxu0 %v155
    %976 = vmatmul.f32.gmra.mxu0 %v868
    %v977 = vpop.f32.mrf.mxu0
    %v978 = vadd.f32 %v958, %v977
    %979 = vdwg.mxu0
    %980 = vmatpush.xpose.msra.mxu0 %v276
    %981 = vmatpush.xpose.msra.mxu0 %v268
    %982 = vmatpush.xpose.msra.mxu0 %v260
    %983 = vmatpush.xpose.msra.mxu0 %v252
    %984 = vmatpush.xpose.msra.mxu0 %v244
    %985 = vmatpush.xpose.msra.mxu0 %v236
    %986 = vmatpush.xpose.msra.mxu0 %v228
    %987 = vmatpush.xpose.msra.mxu0 %v220
    %988 = vmatpush.xpose.msra.mxu0 %v212
    %989 = vmatpush.xpose.msra.mxu0 %v204
    %990 = vmatpush.xpose.msra.mxu0 %v196
    %991 = vmatpush.xpose.msra.mxu0 %v188
    %992 = vmatpush.xpose.msra.mxu0 %v180
    %993 = vmatpush.xpose.msra.mxu0 %v172
    %994 = vmatpush.xpose.msra.mxu0 %v164
    %995 = vmatpush.xpose.msra.mxu0 %v156
    %996 = vmatmul.f32.gmra.mxu0 %v869
    %v997 = vpop.f32.mrf.mxu0
    %v998 = vadd.f32 %v978, %v997
    %999 = vdwg.mxu0
    %1000 = vmatpush.xpose.msra.mxu0 %v277
    %1001 = vmatpush.xpose.msra.mxu0 %v269
    %1002 = vmatpush.xpose.msra.mxu0 %v261
    %1003 = vmatpush.xpose.msra.mxu0 %v253
    %1004 = vmatpush.xpose.msra.mxu0 %v245
    %1005 = vmatpush.xpose.msra.mxu0 %v237
    %1006 = vmatpush.xpose.msra.mxu0 %v229
    %1007 = vmatpush.xpose.msra.mxu0 %v221
    %1008 = vmatpush.xpose.msra.mxu0 %v213
    %1009 = vmatpush.xpose.msra.mxu0 %v205
    %1010 = vmatpush.xpose.msra.mxu0 %v197
    %1011 = vmatpush.xpose.msra.mxu0 %v189
    %1012 = vmatpush.xpose.msra.mxu0 %v181
    %1013 = vmatpush.xpose.msra.mxu0 %v173
    %1014 = vmatpush.xpose.msra.mxu0 %v165
    %1015 = vmatpush.xpose.msra.mxu0 %v157
    %1016 = vmatmul.f32.gmra.mxu0 %v870
    %v1017 = vpop.f32.mrf.mxu0
    %v1018 = vadd.f32 %v998, %v1017
    %1019 = vdwg.mxu0
    %1020 = vmatpush.xpose.msra.mxu0 %v278
    %1021 = vmatpush.xpose.msra.mxu0 %v270
    %1022 = vmatpush.xpose.msra.mxu0 %v262
    %1023 = vmatpush.xpose.msra.mxu0 %v254
    %1024 = vmatpush.xpose.msra.mxu0 %v246
    %1025 = vmatpush.xpose.msra.mxu0 %v238
    %1026 = vmatpush.xpose.msra.mxu0 %v230
    %1027 = vmatpush.xpose.msra.mxu0 %v222
    %1028 = vmatpush.xpose.msra.mxu0 %v214
    %1029 = vmatpush.xpose.msra.mxu0 %v206
    %1030 = vmatpush.xpose.msra.mxu0 %v198
    %1031 = vmatpush.xpose.msra.mxu0 %v190
    %1032 = vmatpush.xpose.msra.mxu0 %v182
    %1033 = vmatpush.xpose.msra.mxu0 %v174
    %1034 = vmatpush.xpose.msra.mxu0 %v166
    %1035 = vmatpush.xpose.msra.mxu0 %v158
    %1036 = vmatmul.f32.gmra.mxu0 %v871
    %v1037 = vpop.f32.mrf.mxu0
    %v1038 = vadd.f32 %v1018, %v1037
    %1039 = vdwg.mxu0
    %v1040 = vmul.f32 %v85, %v85
    %v1041 = vmul.f32 %v86, %v86
    %v1042 = vld [vmem:[%s4] sm:$0x1]
    %v1043 = vmul.f32 %v1042, 2.0
    %v1044 = vmul.f32 %v1043, 1.442695
    %v1045 = vpow.pop %v1044
    %v1047 = vperm.slane %v1045, 0
    %1051 = vst [vmem:[#allocation1] ss:$4 sm:$0xff] %v1040
    %s1052 = scalar_lea.vmem [#allocation1], 32
    %1053 = vst [vmem:[%s1052] ss:$4 sm:$0xff] %v1041
    %v1054 = vld.sshfl [vmem:[#allocation1] sm:$0xff pattern:$0x73625140]
    %v1055 = vld.sshfl [vmem:[#allocation1 + $0x8] sm:$0xff pattern:$0x73625140]
    %v1056 = vld.sshfl [vmem:[#allocation1 + $0x10] sm:$0xff pattern:$0x73625140]
    %v1057 = vld.sshfl [vmem:[#allocation1 + $0x18] sm:$0xff pattern:$0x73625140]
    %v1058 = vld.sshfl [vmem:[#allocation1 + $0x20] sm:$0xff pattern:$0x73625140]
    %v1059 = vld.sshfl [vmem:[#allocation1 + $0x28] sm:$0xff pattern:$0x73625140]
    %v1060 = vld.sshfl [vmem:[#allocation1 + $0x30] sm:$0xff pattern:$0x73625140]
    %v1061 = vld.sshfl [vmem:[#allocation1 + $0x38] sm:$0xff pattern:$0x73625140]
    %1070 = vmatpush.xpose.msra.mxu0 %v840
    %1071 = vmatpush.xpose.msra.mxu0 %v824
    %1072 = vmatpush.xpose.msra.mxu0 %v808
    %1073 = vmatpush.xpose.msra.mxu0 %v792
    %1074 = vmatpush.xpose.msra.mxu0 %v776
    %1075 = vmatpush.xpose.msra.mxu0 %v760
    %1076 = vmatpush.xpose.msra.mxu0 %v744
    %1077 = vmatpush.xpose.msra.mxu0 %v728
    %1078 = vmatpush.xpose.msra.mxu0 %v712
    %1079 = vmatpush.xpose.msra.mxu0 %v696
    %1080 = vmatpush.xpose.msra.mxu0 %v680
    %1081 = vmatpush.xpose.msra.mxu0 %v664
    %1082 = vmatpush.xpose.msra.mxu0 %v648
    %1083 = vmatpush.xpose.msra.mxu0 %v632
    %1084 = vmatpush.xpose.msra.mxu0 %v616
    %1085 = vmatpush.xpose.msra.mxu0 %v600
    %1086 = vmatmul.f32.gmra.mxu0 %v1054
    %v1087 = vpop.f32.mrf.mxu0
    %v1088 = vadd.f32 %v1047, %v1087
    %1089 = vdwg.mxu0
    %1090 = vmatpush.xpose.msra.mxu0 %v842
    %1091 = vmatpush.xpose.msra.mxu0 %v826
    %1092 = vmatpush.xpose.msra.mxu0 %v810
    %1093 = vmatpush.xpose.msra.mxu0 %v794
    %1094 = vmatpush.xpose.msra.mxu0 %v778
    %1095 = vmatpush.xpose.msra.mxu0 %v762
    %1096 = vmatpush.xpose.msra.mxu0 %v746
    %1097 = vmatpush.xpose.msra.mxu0 %v730
    %1098 = vmatpush.xpose.msra.mxu0 %v714
    %1099 = vmatpush.xpose.msra.mxu0 %v698
    %1100 = vmatpush.xpose.msra.mxu0 %v682
    %1101 = vmatpush.xpose.msra.mxu0 %v666
    %1102 = vmatpush.xpose.msra.mxu0 %v650
    %1103 = vmatpush.xpose.msra.mxu0 %v634
    %1104 = vmatpush.xpose.msra.mxu0 %v618
    %1105 = vmatpush.xpose.msra.mxu0 %v602
    %1106 = vmatmul.f32.gmra.mxu0 %v1055
    %v1107 = vpop.f32.mrf.mxu0
    %v1108 = vadd.f32 %v1088, %v1107
    %1109 = vdwg.mxu0
    %1110 = vmatpush.xpose.msra.mxu0 %v844
    %1111 = vmatpush.xpose.msra.mxu0 %v828
    %1112 = vmatpush.xpose.msra.mxu0 %v812
    %1113 = vmatpush.xpose.msra.mxu0 %v796
    %1114 = vmatpush.xpose.msra.mxu0 %v780
    %1115 = vmatpush.xpose.msra.mxu0 %v764
    %1116 = vmatpush.xpose.msra.mxu0 %v748
    %1117 = vmatpush.xpose.msra.mxu0 %v732
    %1118 = vmatpush.xpose.msra.mxu0 %v716
    %1119 = vmatpush.xpose.msra.mxu0 %v700
    %1120 = vmatpush.xpose.msra.mxu0 %v684
    %1121 = vmatpush.xpose.msra.mxu0 %v668
    %1122 = vmatpush.xpose.msra.mxu0 %v652
    %1123 = vmatpush.xpose.msra.mxu0 %v636
    %1124 = vmatpush.xpose.msra.mxu0 %v620
    %1125 = vmatpush.xpose.msra.mxu0 %v604
    %1126 = vmatmul.f32.gmra.mxu0 %v1056
    %v1127 = vpop.f32.mrf.mxu0
    %v1128 = vadd.f32 %v1108, %v1127
    %1129 = vdwg.mxu0
    %1130 = vmatpush.xpose.msra.mxu0 %v846
    %1131 = vmatpush.xpose.msra.mxu0 %v830
    %1132 = vmatpush.xpose.msra.mxu0 %v814
    %1133 = vmatpush.xpose.msra.mxu0 %v798
    %1134 = vmatpush.xpose.msra.mxu0 %v782
    %1135 = vmatpush.xpose.msra.mxu0 %v766
    %1136 = vmatpush.xpose.msra.mxu0 %v750
    %1137 = vmatpush.xpose.msra.mxu0 %v734
    %1138 = vmatpush.xpose.msra.mxu0 %v718
    %1139 = vmatpush.xpose.msra.mxu0 %v702
    %1140 = vmatpush.xpose.msra.mxu0 %v686
    %1141 = vmatpush.xpose.msra.mxu0 %v670
    %1142 = vmatpush.xpose.msra.mxu0 %v654
    %1143 = vmatpush.xpose.msra.mxu0 %v638
    %1144 = vmatpush.xpose.msra.mxu0 %v622
    %1145 = vmatpush.xpose.msra.mxu0 %v606
    %1146 = vmatmul.f32.gmra.mxu0 %v1057
    %v1147 = vpop.f32.mrf.mxu0
    %v1148 = vadd.f32 %v1128, %v1147
    %1149 = vdwg.mxu0
    %1150 = vmatpush.xpose.msra.mxu0 %v848
    %1151 = vmatpush.xpose.msra.mxu0 %v832
    %1152 = vmatpush.xpose.msra.mxu0 %v816
    %1153 = vmatpush.xpose.msra.mxu0 %v800
    %1154 = vmatpush.xpose.msra.mxu0 %v784
    %1155 = vmatpush.xpose.msra.mxu0 %v768
    %1156 = vmatpush.xpose.msra.mxu0 %v752
    %1157 = vmatpush.xpose.msra.mxu0 %v736
    %1158 = vmatpush.xpose.msra.mxu0 %v720
    %1159 = vmatpush.xpose.msra.mxu0 %v704
    %1160 = vmatpush.xpose.msra.mxu0 %v688
    %1161 = vmatpush.xpose.msra.mxu0 %v672
    %1162 = vmatpush.xpose.msra.mxu0 %v656
    %1163 = vmatpush.xpose.msra.mxu0 %v640
    %1164 = vmatpush.xpose.msra.mxu0 %v624
    %1165 = vmatpush.xpose.msra.mxu0 %v608
    %1166 = vmatmul.f32.gmra.mxu0 %v1058
    %v1167 = vpop.f32.mrf.mxu0
    %v1168 = vadd.f32 %v1148, %v1167
    %1169 = vdwg.mxu0
    %1170 = vmatpush.xpose.msra.mxu0 %v850
    %1171 = vmatpush.xpose.msra.mxu0 %v834
    %1172 = vmatpush.xpose.msra.mxu0 %v818
    %1173 = vmatpush.xpose.msra.mxu0 %v802
    %1174 = vmatpush.xpose.msra.mxu0 %v786
    %1175 = vmatpush.xpose.msra.mxu0 %v770
    %1176 = vmatpush.xpose.msra.mxu0 %v754
    %1177 = vmatpush.xpose.msra.mxu0 %v738
    %1178 = vmatpush.xpose.msra.mxu0 %v722
    %1179 = vmatpush.xpose.msra.mxu0 %v706
    %1180 = vmatpush.xpose.msra.mxu0 %v690
    %1181 = vmatpush.xpose.msra.mxu0 %v674
    %1182 = vmatpush.xpose.msra.mxu0 %v658
    %1183 = vmatpush.xpose.msra.mxu0 %v642
    %1184 = vmatpush.xpose.msra.mxu0 %v626
    %1185 = vmatpush.xpose.msra.mxu0 %v610
    %1186 = vmatmul.f32.gmra.mxu0 %v1059
    %v1187 = vpop.f32.mrf.mxu0
    %v1188 = vadd.f32 %v1168, %v1187
    %1189 = vdwg.mxu0
    %1190 = vmatpush.xpose.msra.mxu0 %v852
    %1191 = vmatpush.xpose.msra.mxu0 %v836
    %1192 = vmatpush.xpose.msra.mxu0 %v820
    %1193 = vmatpush.xpose.msra.mxu0 %v804
    %1194 = vmatpush.xpose.msra.mxu0 %v788
    %1195 = vmatpush.xpose.msra.mxu0 %v772
    %1196 = vmatpush.xpose.msra.mxu0 %v756
    %1197 = vmatpush.xpose.msra.mxu0 %v740
    %1198 = vmatpush.xpose.msra.mxu0 %v724
    %1199 = vmatpush.xpose.msra.mxu0 %v708
    %1200 = vmatpush.xpose.msra.mxu0 %v692
    %1201 = vmatpush.xpose.msra.mxu0 %v676
    %1202 = vmatpush.xpose.msra.mxu0 %v660
    %1203 = vmatpush.xpose.msra.mxu0 %v644
    %1204 = vmatpush.xpose.msra.mxu0 %v628
    %1205 = vmatpush.xpose.msra.mxu0 %v612
    %1206 = vmatmul.f32.gmra.mxu0 %v1060
    %v1207 = vpop.f32.mrf.mxu0
    %v1208 = vadd.f32 %v1188, %v1207
    %1209 = vdwg.mxu0
    %1210 = vmatpush.xpose.msra.mxu0 %v854
    %1211 = vmatpush.xpose.msra.mxu0 %v838
    %1212 = vmatpush.xpose.msra.mxu0 %v822
    %1213 = vmatpush.xpose.msra.mxu0 %v806
    %1214 = vmatpush.xpose.msra.mxu0 %v790
    %1215 = vmatpush.xpose.msra.mxu0 %v774
    %1216 = vmatpush.xpose.msra.mxu0 %v758
    %1217 = vmatpush.xpose.msra.mxu0 %v742
    %1218 = vmatpush.xpose.msra.mxu0 %v726
    %1219 = vmatpush.xpose.msra.mxu0 %v710
    %1220 = vmatpush.xpose.msra.mxu0 %v694
    %1221 = vmatpush.xpose.msra.mxu0 %v678
    %1222 = vmatpush.xpose.msra.mxu0 %v662
    %1223 = vmatpush.xpose.msra.mxu0 %v646
    %1224 = vmatpush.xpose.msra.mxu0 %v630
    %1225 = vmatpush.xpose.msra.mxu0 %v614
    %1226 = vmatmul.f32.gmra.mxu0 %v1061
    %v1227 = vpop.f32.mrf.mxu0
    %v1228 = vadd.f32 %v1208, %v1227
    %1229 = vdwg.mxu0
    %v1230 = vrsqrt.pop %v1228
    %v1231 = vmul.f32 %v1230, %v1228
    %v1232 = vmul.f32 %v1231, %v1230
    %v1233 = vmul.f32 0.5, %v1232
    %v1234 = vsub.f32 1.5, %v1233
    %v1235 = vmul.f32 %v1230, %v1234
    %v1236 = vmul.f32 %v1228, %v1235
    %vm1237 = vcmp.eq.f32.partialorder %v1228, inf
    %v1238 = vsel %vm1237, %v1228, %v1236
    %vm1239 = vcmp.eq.f32.partialorder %v1228, 0.0
    %v1240 = vand.u32 %v1228, 2147483648
    %v1241 = vsel %vm1239, %v1240, %v1238
    %v1243 = vrot.slane %v1038, 6
    %v1245 = vrot.slane %v1038, 4
    %v1247 = vrot.slane %v1038, 2
    %vm1249 = vcmask 1041408
    %v1250 = vsel %vm1249, %v1038, %v1243
    %vm1251 = vcmask 1043456
    %v1252 = vsel %vm1251, %v1250, %v1245
    %vm1253 = vcmask 1045504
    %v1254 = vsel %vm1253, %v1252, %v1247
    %v1256 = vrot.slane %v1241, 6
    %v1258 = vrot.slane %v1241, 4
    %v1260 = vrot.slane %v1241, 2
    %v1262 = vsel %vm1249, %v1241, %v1256
    %v1263 = vsel %vm1251, %v1262, %v1258
    %v1264 = vsel %vm1253, %v1263, %v1260
    %v1265 = vld [vmem:[#allocation8] sm:$0xff]
    %v1266 = vmul.f32 %v1264, %v1265
    %v1267 = vadd.f32 %v1254, %v1266
    %v1268 = vlaneseq
    %v1269 = vand.u32 %v1268, 127
    %vm1270 = vcmp.lt.s32.totalorder %v1269, 100
    %v1271 = vsel %vm1270, %v1267, -1e+30
    %1272 = vmax.xlane.f32.xlu0 %v1271
    %v1273 = vpop.xlane.xlu0 %1272
    %v1274 = vsub.f32 %v1271, %v1273
    %v1275 = vmul.f32 %v1274, 1.442695
    %v1276 = vpow.pop %v1275
    %1277 = vadd.xlane.f32.xlu0 %v1276
    %v1278 = vpop.xlane.xlu0 %1277
    %v1279 = vrcp.pop %v1278
    %v1280 = vmul.f32 %v1278, %v1279
    %v1281 = vsub.f32 1.0, %v1280
    %v1282 = vmul.f32 %v1279, %v1281
    %v1283 = vadd.f32 %v1279, %v1282
    %vm1284 = vweird.f32 %v1278
    %vm1285 = vweird.f32 %v1279
    %vm1286 = vmor %vm1284, %vm1285
    %v1287 = vsel %vm1286, %v1279, %v1283
    %v1288 = vand.u32 2147483647, %v1278
    %vm1289 = vcmp.eq.f32.partialorder %v1288, 8.507059e+37
    %v1290 = vand.u32 %v1278, 2147483648
    %v1291 = vor.u32 1.1754944e-38, %v1290
    %v1292 = vsel %vm1289, %v1291, %v1287
    %v1293 = vmul.f32 %v1276, %v1292
    %1294 = vst [vmem:[#allocation10] sm:$0xff] %v1293
    // Predicated region
    $region42: #{tpu_custom_call.1} parent=1 // pred_check
      _
    $region43: #{tpu_custom_call.1} parent=1 // pred_check_branch
      %1296 = sbr.rel (0) target = $region45
    $region44: #{tpu_custom_call.1} parent=1 // pred_region
      %1298 = vsyncadd [#allocation4], 0
      %s1300 = sshll.u32 [#allocation10], 4
      %s1301 = int_to_ptr.vmem [resolvable:$true] %s1300
      %s1302 = sshll.u32 %s6, 4
      %s1303 = int_to_ptr.hbm [resolvable:$true] %s1302
      %1305 = dma.vmem_to_hbm [thread:$0]  %s1301, 128, %s1303, [#allocation4]
    $region45: #{tpu_custom_call.1} parent=1 // pred_fallthru
      _
    // Predicated region
    $region46: #{tpu_custom_call.1} parent=1 // pred_check
      _
    $region47: #{tpu_custom_call.1} parent=1 // pred_check_branch
      %1307 = sbr.rel (0) target = $region49
    $region48: #{tpu_custom_call.1} parent=1 // pred_region
      %1309 = dma.done [#allocation4], 128
    $region49: #{tpu_custom_call.1} parent=1 // pred_fallthru
      _
    %1310 = vsyncpa [#allocation3], 1
    %1311 = vsyncpa [#allocation6], 1
    %1312 = vsyncpa [#allocation9], 1
    %1313 = vsyncpa [#allocation4], 1

</llo_original>
